<compile_context>
chip_gen: v7x
topology: tpu7x:2x2x1
jax: 0.10.0
libtpu: 0.0.40
codegen_flags: <defaults>
</compile_context>

<pallas_src>
import functools

import jax
import jax.numpy as jnp
from jax import lax
from jax.experimental import pallas as pl
from jax.experimental.pallas import tpu as pltpu


_MiB = 1024 * 1024


# --------------------------------------------------------------------------- #
# Hardware budgeting helpers
# --------------------------------------------------------------------------- #
def _vmem_capacity_bytes():
    """Physical VMEM per TensorCore (128 MiB v5e/v6e, 64 MiB v7x); safe fallback."""
    try:
        return int(pltpu.get_tpu_info().vmem_capacity_bytes)
    except Exception:        # query unavailable -> assume the smallest generation
        return 64 * _MiB


def _vmem_budget_bytes():
    """Scoped-VMEM budget requested from the compiler (leave internal headroom)."""
    return int(_vmem_capacity_bytes() * 0.70)


def _choose_l_tile(channels, length, itemsize, max_tile_bytes):
    """Largest L tile (multiple of 128, or full L) with (C, TL) slab <= max_tile_bytes."""
    per_lane = max(1, channels * itemsize)
    if length * per_lane <= max_tile_bytes:
        return length
    tl = max_tile_bytes // per_lane
    tl = max(128, (tl // 128) * 128)          # lane-dense floor
    return min(tl, length)


# --------------------------------------------------------------------------- #
# Kernels
# --------------------------------------------------------------------------- #
def _se_mlp(s, w1_ref, b1_ref, w2_ref, b2_ref):
    """gate = sigmoid(relu(s @ W1 + b1) @ W2 + b2), f32, eval-mode BN pre-folded."""
    h = jnp.dot(s, w1_ref[...], preferred_element_type=jnp.float32) + b1_ref[...]
    h = jnp.maximum(h, 0.0)
    z = jnp.dot(h, w2_ref[...], preferred_element_type=jnp.float32) + b2_ref[...]
    return jax.nn.sigmoid(z)


def _lca_fused_kernel(x_ref, w1_ref, b1_ref, w2_ref, b2_ref, o_ref, *, inv_l):
    """Single-pass LCA for one batch whose (C, L) slab fits in VMEM:
    pool + SE-MLP + scale.  HBM traffic: one read + one write of x."""
    x = x_ref[...]                                               # (1, C, L)
    s = jnp.sum(x.astype(jnp.float32), axis=-1) * inv_l          # (1, C) f32 mean
    g = _se_mlp(s, w1_ref, b1_ref, w2_ref, b2_ref)               # (1, C)
    o_ref[...] = x * g[:, :, None].astype(x.dtype)


def _pool_mlp_kernel(x_ref, w1_ref, b1_ref, w2_ref, b2_ref, g_ref, acc_ref, *,
                     true_l, tile_l, inv_l):
    """Streaming pass A: f32 sum over L in a VMEM scratch; on the last L tile
    apply the SE MLP (resident CxC weights) and emit the per-(B, C) gate."""
    l_idx = pl.program_id(1)
    last = pl.num_programs(1) - 1

    @pl.when(l_idx == 0)
    def _init():
        acc_ref[...] = jnp.zeros_like(acc_ref)

    x = x_ref[...].astype(jnp.float32)                           # (1, C, TL)

    if true_l % tile_l != 0:
        # Ragged L: pay the iota/compare/select only on the final partial tile.
        @pl.when(l_idx != last)
        def _interior():
            acc_ref[...] += jnp.sum(x, axis=-1, keepdims=True)

        @pl.when(l_idx == last)
        def _tail():
            pos = l_idx * tile_l + lax.broadcasted_iota(jnp.int32, x.shape, 2)
            xm = jnp.where(pos < true_l, x, 0.0)
            acc_ref[...] += jnp.sum(xm, axis=-1, keepdims=True)
    else:
        acc_ref[...] += jnp.sum(x, axis=-1, keepdims=True)

    @pl.when(l_idx == last)
    def _finalize():
        s = acc_ref[...][:, :, 0] * inv_l                        # (1, C) true mean
        g = _se_mlp(s, w1_ref, b1_ref, w2_ref, b2_ref)           # (1, C)
        g_ref[...] = g[:, :, None].astype(g_ref.dtype)


def _scale_kernel(x_ref, g_ref, o_ref):
    """Streaming pass B: out = x * gate, lane-dense (1, C, TL) tiles."""
    o_ref[...] = x_ref[...] * g_ref[...].astype(x_ref.dtype)


# --------------------------------------------------------------------------- #
# Wrapper
# --------------------------------------------------------------------------- #
def _fold_bn(w, b, gamma, beta, mean, var, eps):
    """Fold eval-mode BatchNorm1d into a preceding 1x1 conv's (C_out, C_in) weight."""
    w = w.astype(jnp.float32)
    b = b.astype(jnp.float32)
    scale = gamma.astype(jnp.float32) * lax.rsqrt(var.astype(jnp.float32) + eps)
    w_eff = w * scale[:, None]
    b_eff = (b - mean.astype(jnp.float32)) * scale + beta.astype(jnp.float32)
    return w_eff, b_eff


def lca_forward(x, w1, b1, bn1, w2, b2, bn2, eps=1e-5, *,
                force_streaming_tile_l=None):
    """LCA forward.  x: (B, C, L).  w*: (C, C) or (C, C, 1) 1x1-conv weights.
    bn* = (gamma, beta, running_mean, running_var) — eval-mode running stats."""
    batch, channels, length = x.shape
    dt = x.dtype
    itemsize = dt.itemsize

    if w1.ndim == 3:
        w1 = w1[:, :, 0]
    if w2.ndim == 3:
        w2 = w2[:, :, 0]

    # Fold eval-mode BN into the 1x1 convs; pre-transpose for (rows,C)@(C,C) matmuls.
    w1_eff, b1_eff = _fold_bn(w1, b1, *bn1, eps)
    w2_eff, b2_eff = _fold_bn(w2, b2, *bn2, eps)
    w1_t = w1_eff.T
    w2_t = w2_eff.T
    b1_r = b1_eff.reshape(1, channels)
    b2_r = b2_eff.reshape(1, channels)

    inv_l = 1.0 / length
    capacity = _vmem_capacity_bytes()
    budget = _vmem_budget_bytes()
    weight_bytes = 2 * channels * channels * 4 + 2 * channels * 4

    # Constant index_maps -> weights/biases are DMA'd once and stay resident.
    const_spec_w = pl.BlockSpec((channels, channels), lambda *_: (0, 0))
    const_spec_b = pl.BlockSpec((1, channels), lambda *_: (0, 0))

    # ---------------- fused single-pass path (x read once, written once) ---- #
    slab_bytes = channels * length * itemsize
    # Generous working-set estimate: 2x in + 2x out double-buffers, one f32 temp
    # for the pooled cast, one result temp, plus the resident weights.
    fused_ws = 6 * slab_bytes + channels * length * 4 + weight_bytes + 2 * _MiB
    if force_streaming_tile_l is None and fused_ws <= budget:
        return pl.pallas_call(
            functools.partial(_lca_fused_kernel, inv_l=inv_l),
            out_shape=jax.ShapeDtypeStruct((batch, channels, length), dt),
            grid=(batch,),
            in_specs=[
                pl.BlockSpec((1, channels, length), lambda b: (b, 0, 0)),
                const_spec_w, const_spec_b, const_spec_w, const_spec_b,
            ],
            out_specs=pl.BlockSpec((1, channels, length), lambda b: (b, 0, 0)),
            compiler_params=pltpu.CompilerParams(
                dimension_semantics=("parallel",),
                vmem_limit_bytes=int(budget)),
            cost_estimate=pl.CostEstimate(
                flops=2 * batch * channels * length
                + 4 * batch * channels * channels,
                transcendentals=batch * channels,
                bytes_accessed=2 * batch * channels * length * itemsize
                + 2 * channels * channels * 4),
        )(x, w1_t, b1_r, w2_t, b2_r)

    # ---------------- streaming fallback: pass A (pool+MLP) + pass B (scale) - #
    if force_streaming_tile_l is not None:
        tile_l = min(int(force_streaming_tile_l), length)
    else:
        # Pass B needs ~4x tile (double-buffered in + out); keep extra slack.
        tile_bytes = max(_MiB, (budget - weight_bytes - 2 * _MiB) // 5)
        tile_l = _choose_l_tile(channels, length, itemsize, tile_bytes)
    n_l = pl.cdiv(length, tile_l)

    tile_slab = channels * tile_l * itemsize
    pass_a_ws = 2 * tile_slab + channels * tile_l * 4 + weight_bytes + 2 * _MiB
    pass_b_ws = 4 * tile_slab + 2 * _MiB
    vmem_a = int(min(capacity, max(budget, pass_a_ws)))
    vmem_b = int(min(capacity, max(budget, pass_b_ws)))
    # TODO(synk): if channels*itemsize is so large that even a 128-lane tile
    # overflows VMEM, the channel axis would also need tiling (not implemented).

    gate = pl.pallas_call(
        functools.partial(_pool_mlp_kernel, true_l=length, tile_l=tile_l,
                          inv_l=inv_l),
        out_shape=jax.ShapeDtypeStruct((batch, channels, 1), jnp.float32),
        grid=(batch, n_l),
        in_specs=[
            pl.BlockSpec((1, channels, tile_l), lambda b, l: (b, 0, l)),
            const_spec_w, const_spec_b, const_spec_w, const_spec_b,
        ],
        out_specs=pl.BlockSpec((1, channels, 1), lambda b, l: (b, 0, 0)),
        scratch_shapes=[pltpu.VMEM((1, channels, 1), jnp.float32)],
        compiler_params=pltpu.CompilerParams(
            dimension_semantics=("parallel", "arbitrary"),
            vmem_limit_bytes=vmem_a),
        cost_estimate=pl.CostEstimate(
            flops=batch * channels * length + 4 * batch * channels * channels,
            transcendentals=batch * channels,
            bytes_accessed=batch * channels * length * itemsize
            + batch * channels * 4 + 2 * channels * channels * 4),
    )(x, w1_t, b1_r, w2_t, b2_r)

    out = pl.pallas_call(
        _scale_kernel,
        out_shape=jax.ShapeDtypeStruct((batch, channels, length), dt),
        grid=(batch, n_l),
        in_specs=[
            pl.BlockSpec((1, channels, tile_l), lambda b, l: (b, 0, l)),
            pl.BlockSpec((1, channels, 1), lambda b, l: (b, 0, 0)),
        ],
        out_specs=pl.BlockSpec((1, channels, tile_l), lambda b, l: (b, 0, l)),
        compiler_params=pltpu.CompilerParams(
            dimension_semantics=("parallel", "parallel"),
            vmem_limit_bytes=vmem_b),
        cost_estimate=pl.CostEstimate(
            flops=batch * channels * length,
            transcendentals=0,
            bytes_accessed=2 * batch * channels * length * itemsize
            + batch * channels * 4),
    )(x, gate)

    return out


# --------------------------------------------------------------------------- #
# Pure-JAX reference (eval-mode BN), for a sanity check
# --------------------------------------------------------------------------- #
def lca_reference(x, w1, b1, bn1, w2, b2, bn2, eps=1e-5):
    def bn(z, params):
        gamma, beta, mean, var = params
        return ((z - mean[None, :, None])
                * lax.rsqrt(var[None, :, None] + eps)
                * gamma[None, :, None] + beta[None, :, None])

    y = jnp.mean(x.astype(jnp.float32), axis=-1, keepdims=True)       # (B, C, 1)
    y = jnp.einsum("oc,bcl->bol", w1.astype(jnp.float32), y) + b1[None, :, None]
    y = jnp.maximum(bn(y, bn1), 0.0)
    y = jnp.einsum("oc,bcl->bol", w2.astype(jnp.float32), y) + b2[None, :, None]
    y = jax.nn.sigmoid(bn(y, bn2))
    return (x * y.astype(x.dtype)).astype(x.dtype)


# --------------------------------------------------------------------------- #
# Demo / correctness check
# --------------------------------------------------------------------------- #
if __name__ == "__main__":
    def run_case(batch, channels, length, force_tile=None):
        ks = jax.random.split(jax.random.PRNGKey(0), 9)
        x = jax.random.normal(ks[0], (batch, channels, length), jnp.float32)
        w1 = jax.random.normal(ks[1], (channels, channels), jnp.float32) * 0.3
        b1 = jax.random.normal(ks[2], (channels,), jnp.float32) * 0.1
        w2 = jax.random.normal(ks[3], (channels, channels), jnp.float32) * 0.3
        b2 = jax.random.normal(ks[4], (channels,), jnp.float32) * 0.1
        bn1 = (jax.random.uniform(ks[5], (channels,), jnp.float32, 0.5, 1.5),   # gamma
               jax.random.normal(ks[6], (channels,), jnp.float32) * 0.1,        # beta
               jax.random.normal(ks[7], (channels,), jnp.float32) * 0.1,        # mean
               jax.random.uniform(ks[8], (channels,), jnp.float32, 0.5, 1.5))   # var
        bn2 = tuple(jnp.roll(p, 1) for p in bn1)

        fwd = jax.jit(functools.partial(lca_forward,
                                        force_streaming_tile_l=force_tile))
        out = jax.block_until_ready(fwd(x, w1, b1, bn1, w2, b2, bn2))
        ref = lca_reference(x, w1, b1, bn1, w2, b2, bn2)
        assert out.shape == x.shape and out.dtype == x.dtype
        err = float(jnp.max(jnp.abs(out - ref)))
        assert err < 5e-3, f"max abs err {err}"

    run_case(2, 8, 16)                      # fused single-pass path
    run_case(2, 16, 200, force_tile=128)    # streaming 2-pass path (ragged L tail)
    print("KERNEL_OK")
</pallas_src>

<mosaic_0001>
module attributes {stable_mosaic.version = 11 : i64} {
  func.func @_lca_fused_kernel(%arg0: i32, %arg1: memref<1x8x16xf32, #tpu.memory_space<vmem>>, %arg2: memref<8x8xf32, #tpu.memory_space<vmem>>, %arg3: memref<1x8xf32, #tpu.memory_space<vmem>>, %arg4: memref<8x8xf32, #tpu.memory_space<vmem>>, %arg5: memref<1x8xf32, #tpu.memory_space<vmem>>, %arg6: memref<1x8x16xf32, #tpu.memory_space<vmem>>) attributes {dimension_semantics = [#tpu.dimension_semantics<parallel>], iteration_bounds = array<i64: 2>, scalar_prefetch = 0 : i64, scratch_operands = 0 : i64, tpu.core_type = #tpu.core_type<tc>, window_params = [{transform_indices = @transform_0, window_bounds = array<i64: 1, 8, 16>}, {pipeline_mode = #tpu.pipeline_mode<synchronous>, transform_indices = @transform_1, window_bounds = array<i64: 8, 8>}, {pipeline_mode = #tpu.pipeline_mode<synchronous>, transform_indices = @transform_2, window_bounds = array<i64: 1, 8>}, {pipeline_mode = #tpu.pipeline_mode<synchronous>, transform_indices = @transform_3, window_bounds = array<i64: 8, 8>}, {pipeline_mode = #tpu.pipeline_mode<synchronous>, transform_indices = @transform_4, window_bounds = array<i64: 1, 8>}, {transform_indices = @transform_5, window_bounds = array<i64: 1, 8, 16>}]} {
    %c0 = arith.constant 0 : index
    %c0_0 = arith.constant 0 : index
    %c0_1 = arith.constant 0 : index
    %0 = vector.load %arg1[%c0, %c0_0, %c0_1] : memref<1x8x16xf32, #tpu.memory_space<vmem>>, vector<1x8x16xf32>
    %cst = arith.constant dense<0.000000e+00> : vector<1x8xf32>
    %1 = vector.multi_reduction <add>, %0, %cst [2] : vector<1x8x16xf32> to vector<1x8xf32>
    %cst_2 = arith.constant 6.250000e-02 : f32
    %2 = vector.broadcast %cst_2 : f32 to vector<1x8xf32>
    %3 = arith.mulf %1, %2 : vector<1x8xf32>
    %c0_3 = arith.constant 0 : index
    %c0_4 = arith.constant 0 : index
    %4 = vector.load %arg2[%c0_3, %c0_4] : memref<8x8xf32, #tpu.memory_space<vmem>>, vector<8x8xf32>
    %cst_5 = arith.constant dense<0.000000e+00> : vector<1x8xf32>
    %5 = tpu.matmul %3, %4, %cst_5 {dimension_numbers = #tpu.dot_dimension_numbers<[1], [0], [0], [1], [0, 0, 1, 1], [], []>} : vector<1x8xf32>, vector<8x8xf32>, vector<1x8xf32> -> vector<1x8xf32>
    %c0_6 = arith.constant 0 : index
    %c0_7 = arith.constant 0 : index
    %6 = vector.load %arg3[%c0_6, %c0_7] : memref<1x8xf32, #tpu.memory_space<vmem>>, vector<1x8xf32>
    %7 = arith.addf %5, %6 : vector<1x8xf32>
    %cst_8 = arith.constant 0.000000e+00 : f32
    %8 = vector.broadcast %cst_8 : f32 to vector<1x8xf32>
    %9 = arith.maximumf %7, %8 : vector<1x8xf32>
    %c0_9 = arith.constant 0 : index
    %c0_10 = arith.constant 0 : index
    %10 = vector.load %arg4[%c0_9, %c0_10] : memref<8x8xf32, #tpu.memory_space<vmem>>, vector<8x8xf32>
    %cst_11 = arith.constant dense<0.000000e+00> : vector<1x8xf32>
    %11 = tpu.matmul %9, %10, %cst_11 {dimension_numbers = #tpu.dot_dimension_numbers<[1], [0], [0], [1], [0, 0, 1, 1], [], []>} : vector<1x8xf32>, vector<8x8xf32>, vector<1x8xf32> -> vector<1x8xf32>
    %c0_12 = arith.constant 0 : index
    %c0_13 = arith.constant 0 : index
    %12 = vector.load %arg5[%c0_12, %c0_13] : memref<1x8xf32, #tpu.memory_space<vmem>>, vector<1x8xf32>
    %13 = arith.addf %11, %12 : vector<1x8xf32>
    %14 = arith.negf %13 : vector<1x8xf32>
    %15 = math.exp %14 : vector<1x8xf32>
    %cst_14 = arith.constant 1.000000e+00 : f32
    %16 = vector.broadcast %cst_14 : f32 to vector<1x8xf32>
    %17 = arith.addf %16, %15 : vector<1x8xf32>
    %18 = arith.divf %16, %17 : vector<1x8xf32>
    %19 = vector.shape_cast %18 : vector<1x8xf32> to vector<1x8x1xf32>
    %20 = vector.broadcast %19 : vector<1x8x1xf32> to vector<1x8x16xf32>
    %21 = arith.mulf %0, %20 : vector<1x8x16xf32>
    %c0_15 = arith.constant 0 : index
    %c0_16 = arith.constant 0 : index
    %c0_17 = arith.constant 0 : index
    %22 = vector.load %arg6[%c0_15, %c0_16, %c0_17] : memref<1x8x16xf32, #tpu.memory_space<vmem>>, vector<1x8x16xf32>
    tpu.vector_store %arg6[%c0_15, %c0_16, %c0_17], %21 {strides = array<i32>} : memref<1x8x16xf32, #tpu.memory_space<vmem>>, vector<1x8x16xf32>,
    return
  }
  func.func @transform_0(%arg0: i32) -> (i32, i32, i32) {
    %c0_i32 = arith.constant 0 : i32
    %c0_i32_0 = arith.constant 0 : i32
    %c0_i32_1 = arith.constant 0 : i32
    return %arg0, %c0_i32, %c0_i32_0 : i32, i32, i32
  }
  func.func @transform_1(%arg0: i32) -> (i32, i32) {
    %c0_i32 = arith.constant 0 : i32
    %c0_i32_0 = arith.constant 0 : i32
    %c0_i32_1 = arith.constant 0 : i32
    return %c0_i32, %c0_i32_0 : i32, i32
  }
  func.func @transform_2(%arg0: i32) -> (i32, i32) {
    %c0_i32 = arith.constant 0 : i32
    %c0_i32_0 = arith.constant 0 : i32
    %c0_i32_1 = arith.constant 0 : i32
    return %c0_i32, %c0_i32_0 : i32, i32
  }
  func.func @transform_3(%arg0: i32) -> (i32, i32) {
    %c0_i32 = arith.constant 0 : i32
    %c0_i32_0 = arith.constant 0 : i32
    %c0_i32_1 = arith.constant 0 : i32
    return %c0_i32, %c0_i32_0 : i32, i32
  }
  func.func @transform_4(%arg0: i32) -> (i32, i32) {
    %c0_i32 = arith.constant 0 : i32
    %c0_i32_0 = arith.constant 0 : i32
    %c0_i32_1 = arith.constant 0 : i32
    return %c0_i32, %c0_i32_0 : i32, i32
  }
  func.func @transform_5(%arg0: i32) -> (i32, i32, i32) {
    %c0_i32 = arith.constant 0 : i32
    %c0_i32_0 = arith.constant 0 : i32
    %c0_i32_1 = arith.constant 0 : i32
    return %arg0, %c0_i32, %c0_i32_0 : i32, i32, i32
  }
}

</mosaic_0001>

<llo_original>
// kernel: lca_forward.1
$region0: #{lca_forward.1}
  #allocation0 [shape = 'u32[]', space=smem, size = 0x4, offset = 0x4, fixed_abs, tag = 'smem constant byte address 0x4 - core index']
  #allocation1 [shape = 'u32[144,128]{1,0:T(1,128)}', space=vmem, size = 0x12000, scoped, tag = 'internal scratch']
  %s0 = inlined_call_operand.vmem [shape: f32[2,8,16], index: 0, kind: input, shape index: {}]
  %s1 = inlined_call_operand.vmem [shape: f32[8,8], index: 1, kind: input, shape index: {}]
  %s2 = inlined_call_operand.vmem [shape: f32[1,8], index: 2, kind: input, shape index: {}]
  %s3 = inlined_call_operand.vmem [shape: f32[8,8], index: 3, kind: input, shape index: {}]
  %s4 = inlined_call_operand.vmem [shape: f32[1,8], index: 4, kind: input, shape index: {}]
  %s5 = inlined_call_operand.hbm [shape: f32[2,8,16], index: 5, kind: output, shape index: {}]
  %s6 = sld [smem:[#allocation0]]
  $region53: #{lca_forward.1} parent=0
    _
  %s8 = ssub.s32 1, %s6
  %s9 = scalar_select 0, %s8, %s6
  $region1: #{lca_forward.1} parent=0
    #allocation2 [shape = 'u8[8192]{0}', space=vmem, size = 0x2000, scoped, tag = 'output window, operand 0']
    #allocation3 [shape = 's32[2]{0}', space=sflag, size = 0x8, scoped, tag = 'scoped memory for lca_forward.1']
    %10 = vsyncpa [#allocation3], 0
    %s11 = scalar_lea.sflag [#allocation3], 1
    %12 = vsyncpa %s11, 0
    loop: start=0, step=1, limit=4
    $region2: #{lca_forward.1} parent=1 // loop_pre_header
      _
    $region3: #{lca_forward.1} parent=1 // loop_header
      %s14 = sphi 0, %s18
      %p15 = scmp.ge.s32.totalorder %s14, 4
      %s24 = sphi 0, %s26
      %s27 = sphi 0, %s24
      %s28 = sphi 0, %s27
      %s44 = sphi 0, %s28
      %s48 = sphi 0, %s48
      %s50 = sphi 0, %s48
      %s51 = sphi 0, %s50
      %s65 = sphi 0, %s51
      %s69 = sphi 0, %s69
      %s71 = sphi 0, %s69
      %s72 = sphi 0, %s71
      %s86 = sphi 0, %s72
      %s90 = sphi 0, %s90
      %s92 = sphi 0, %s90
      %s93 = sphi 0, %s92
      %s107 = sphi 0, %s93
      %s111 = sphi 0, %s111
      %s113 = sphi 0, %s111
      %s114 = sphi 0, %s113
      %s128 = sphi 0, %s114
      %s134 = sphi 0, %s136
      %s137 = sphi 0, %s134
      %s138 = sphi 0, %s137
      %s154 = sphi 0, %s138
    $region4: #{lca_forward.1} parent=1 // loop_header_branch
      %17 = sbr.rel (%p15) target = $region8
    $region5: #{lca_forward.1} parent=1 // loop_body
      %s19 = ssub.s32 %s14, 1
      %s20 = ssub.s32 %s14, 2
      %s21 = sadd.s32 %s14, 1
      %s22 = ssub.s32 %s14, %s21
      %p23 = scmp.eq.s32.totalorder %s22, 0
      %s25 = sadd.s32 %s24, 1
      %s26 = scalar_select %p23, %s24, %s25
      %p29 = pneg %p23
      %p30 = scmp.eq.s32.totalorder %s14, 1
      %p31 = por %p29, %p30
      %p32 = scmp.ne.s32.totalorder %s24, %s27
      %p33 = scmp.eq.s32.totalorder %s14, 0
      %p34 = por %p32, %p33
      %p35 = scmp.ne.s32.totalorder %s24, %s27
      %p36 = scmp.eq.s32.totalorder %s19, 1
      %p37 = por %p35, %p36
      %p38 = scmp.ne.s32.totalorder %s27, %s28
      %p39 = scmp.eq.s32.totalorder %s19, 0
      %p40 = por %p38, %p39
      %p41 = scmp.ne.s32.totalorder %s27, %s28
      %p42 = scmp.eq.s32.totalorder %s20, 1
      %p43 = por %p41, %p42
      %p45 = scmp.ne.s32.totalorder %s28, %s44
      %p46 = scmp.eq.s32.totalorder %s20, 0
      %p47 = por %p45, %p46
      %s49 = sadd.s32 %s48, 1
      %p52 = scmp.eq.s32.totalorder %s14, 1
      %p53 = scmp.ne.s32.totalorder %s48, %s50
      %p54 = scmp.eq.s32.totalorder %s14, 0
      %p55 = por %p53, %p54
      %p56 = scmp.ne.s32.totalorder %s48, %s50
      %p57 = scmp.eq.s32.totalorder %s19, 1
      %p58 = por %p56, %p57
      %p59 = scmp.ne.s32.totalorder %s50, %s51
      %p60 = scmp.eq.s32.totalorder %s19, 0
      %p61 = por %p59, %p60
      %p62 = scmp.ne.s32.totalorder %s50, %s51
      %p63 = scmp.eq.s32.totalorder %s20, 1
      %p64 = por %p62, %p63
      %p66 = scmp.ne.s32.totalorder %s51, %s65
      %p67 = scmp.eq.s32.totalorder %s20, 0
      %p68 = por %p66, %p67
      %s70 = sadd.s32 %s69, 1
      %p73 = scmp.eq.s32.totalorder %s14, 1
      %p74 = scmp.ne.s32.totalorder %s69, %s71
      %p75 = scmp.eq.s32.totalorder %s14, 0
      %p76 = por %p74, %p75
      %p77 = scmp.ne.s32.totalorder %s69, %s71
      %p78 = scmp.eq.s32.totalorder %s19, 1
      %p79 = por %p77, %p78
      %p80 = scmp.ne.s32.totalorder %s71, %s72
      %p81 = scmp.eq.s32.totalorder %s19, 0
      %p82 = por %p80, %p81
      %p83 = scmp.ne.s32.totalorder %s71, %s72
      %p84 = scmp.eq.s32.totalorder %s20, 1
      %p85 = por %p83, %p84
      %p87 = scmp.ne.s32.totalorder %s72, %s86
      %p88 = scmp.eq.s32.totalorder %s20, 0
      %p89 = por %p87, %p88
      %s91 = sadd.s32 %s90, 1
      %p94 = scmp.eq.s32.totalorder %s14, 1
      %p95 = scmp.ne.s32.totalorder %s90, %s92
      %p96 = scmp.eq.s32.totalorder %s14, 0
      %p97 = por %p95, %p96
      %p98 = scmp.ne.s32.totalorder %s90, %s92
      %p99 = scmp.eq.s32.totalorder %s19, 1
      %p100 = por %p98, %p99
      %p101 = scmp.ne.s32.totalorder %s92, %s93
      %p102 = scmp.eq.s32.totalorder %s19, 0
      %p103 = por %p101, %p102
      %p104 = scmp.ne.s32.totalorder %s92, %s93
      %p105 = scmp.eq.s32.totalorder %s20, 1
      %p106 = por %p104, %p105
      %p108 = scmp.ne.s32.totalorder %s93, %s107
      %p109 = scmp.eq.s32.totalorder %s20, 0
      %p110 = por %p108, %p109
      %s112 = sadd.s32 %s111, 1
      %p115 = scmp.eq.s32.totalorder %s14, 1
      %p116 = scmp.ne.s32.totalorder %s111, %s113
      %p117 = scmp.eq.s32.totalorder %s14, 0
      %p118 = por %p116, %p117
      %p119 = scmp.ne.s32.totalorder %s111, %s113
      %p120 = scmp.eq.s32.totalorder %s19, 1
      %p121 = por %p119, %p120
      %p122 = scmp.ne.s32.totalorder %s113, %s114
      %p123 = scmp.eq.s32.totalorder %s19, 0
      %p124 = por %p122, %p123
      %p125 = scmp.ne.s32.totalorder %s113, %s114
      %p126 = scmp.eq.s32.totalorder %s20, 1
      %p127 = por %p125, %p126
      %p129 = scmp.ne.s32.totalorder %s114, %s128
      %p130 = scmp.eq.s32.totalorder %s20, 0
      %p131 = por %p129, %p130
      %s132 = ssub.s32 %s14, %s21
      %p133 = scmp.eq.s32.totalorder %s132, 0
      %s135 = sadd.s32 %s134, 1
      %s136 = scalar_select %p133, %s134, %s135
      %p139 = pneg %p133
      %p140 = scmp.eq.s32.totalorder %s14, 1
      %p141 = por %p139, %p140
      %p142 = scmp.ne.s32.totalorder %s134, %s137
      %p143 = scmp.eq.s32.totalorder %s14, 0
      %p144 = por %p142, %p143
      %p145 = scmp.ne.s32.totalorder %s134, %s137
      %p146 = scmp.eq.s32.totalorder %s19, 1
      %p147 = por %p145, %p146
      %p148 = scmp.ne.s32.totalorder %s137, %s138
      %p149 = scmp.eq.s32.totalorder %s19, 0
      %p150 = por %p148, %p149
      %p151 = scmp.ne.s32.totalorder %s137, %s138
      %p152 = scmp.eq.s32.totalorder %s20, 1
      %p153 = por %p151, %p152
      %p155 = scmp.ne.s32.totalorder %s138, %s154
      %p156 = scmp.eq.s32.totalorder %s20, 0
      %p157 = por %p155, %p156
      %p158 = scmp.le.s32.totalorder 1, %s14
      %p159 = scmp.lt.s32.totalorder %s14, 3
      %p160 = pnand %p158, %p159
      %p161 = pneg %p160
      // Predicated region
      $region9: #{lca_forward.1} parent=5 // pred_check
        _
      $region10: #{lca_forward.1} parent=5 // pred_check_branch
        %163 = sbr.rel (%p160) target = $region12
      $region11: #{lca_forward.1} parent=5 // pred_region
        %s164 = ssub.s32 %s14, 1
        // Predicated region
        $region13: #{lca_forward.1} parent=11 // pred_check
          %p165 = pneg %p61
        $region14: #{lca_forward.1} parent=11 // pred_check_branch
          %167 = sbr.rel (%p165) target = $region16
        $region15: #{lca_forward.1} parent=11 // pred_region
          _
        $region16: #{lca_forward.1} parent=11 // pred_fallthru
          _
        // Predicated region
        $region17: #{lca_forward.1} parent=11 // pred_check
          %p168 = pneg %p82
        $region18: #{lca_forward.1} parent=11 // pred_check_branch
          %170 = sbr.rel (%p168) target = $region20
        $region19: #{lca_forward.1} parent=11 // pred_region
          _
        $region20: #{lca_forward.1} parent=11 // pred_fallthru
          _
        // Predicated region
        $region21: #{lca_forward.1} parent=11 // pred_check
          %p171 = pneg %p103
        $region22: #{lca_forward.1} parent=11 // pred_check_branch
          %173 = sbr.rel (%p171) target = $region24
        $region23: #{lca_forward.1} parent=11 // pred_region
          _
        $region24: #{lca_forward.1} parent=11 // pred_fallthru
          _
        // Predicated region
        $region25: #{lca_forward.1} parent=11 // pred_check
          %p174 = pneg %p124
        $region26: #{lca_forward.1} parent=11 // pred_check_branch
          %176 = sbr.rel (%p174) target = $region28
        $region27: #{lca_forward.1} parent=11 // pred_region
          _
        $region28: #{lca_forward.1} parent=11 // pred_fallthru
          _
      $region12: #{lca_forward.1} parent=5 // pred_fallthru
        _
      %p177 = scmp.lt.s32.totalorder %s14, 2
      // Predicated region
      $region29: #{lca_forward.1} parent=5 // pred_check
        %p178 = pneg %p177
      $region30: #{lca_forward.1} parent=5 // pred_check_branch
        %180 = sbr.rel (%p178) target = $region32
      $region31: #{lca_forward.1} parent=5 // pred_region
        // Predicated region
        $region33: #{lca_forward.1} parent=31 // pred_check
          %p181 = pneg %p34
        $region34: #{lca_forward.1} parent=31 // pred_check_branch
          %183 = sbr.rel (%p181) target = $region36
        $region35: #{lca_forward.1} parent=31 // pred_region
          %p184 = scmp.lt.s32.totalorder %s14, 1
          %s185 = scalar_select %p184, %s14, 1
          %s186 = smul.addr %s185, 8
          %s187 = scalar_lea.vmem %s0, %s186
        $region36: #{lca_forward.1} parent=31 // pred_fallthru
          _
      $region32: #{lca_forward.1} parent=5 // pred_fallthru
        _
      %p188 = scmp.le.s32.totalorder 1, %s14
      %p189 = scmp.lt.s32.totalorder %s14, 3
      %p190 = pnand %p188, %p189
      %p191 = pneg %p190
      // Predicated region
      $region37: #{lca_forward.1} parent=5 // pred_check
        _
      $region38: #{lca_forward.1} parent=5 // pred_check_branch
        %193 = sbr.rel (%p190) target = $region40
      $region39: #{lca_forward.1} parent=5 // pred_region
        %s194 = ssub.s32 %s14, 1
        %p195 = scmp.lt.s32.totalorder %s19, 1
        %s196 = scalar_select %p195, %s19, 1
        %s197 = smul.addr %s196, 8
        %s198 = scalar_lea.vmem %s0, %s197
        %p199 = pneg %p40
        %p200 = pneg %p37
        %p201 = pneg %p61
        %p202 = pneg %p58
        %p203 = pneg %p82
        %p204 = pneg %p79
        %p205 = pneg %p103
        %p206 = pneg %p100
        %p207 = pneg %p124
        %p208 = pneg %p121
        %p209 = pneg %p150
        %p210 = pneg %p147
        %s211 = sand.u32 %s137, 1
        %s212 = scalar_lea.sflag [#allocation3], %s211
        %s213 = sand.u32 %s137, 1
        %s214 = smul.addr %s213, 8
        %s215 = scalar_lea.vmem [#allocation2], %s214
        %p216 = scmp.lt.s32.totalorder %s19, 1
        %s217 = scalar_select %p216, %s19, 1
        %s218 = smul.addr %s217, 8
        %s219 = scalar_lea.vmem %s0, %s218
        %v220 = vld [vmem:[%s219] sm:$0xff]
        %vm221 = vcmask 130048
        %v222 = vsel %vm221, %v220, 0.0
        %223 = vadd.xlane.f32.xlu0 %v222
        %v224 = vpop.xlane.xlu0 %223
        %v225 = vmul.f32 %v224, 0.0625
        %v226 = vld [vmem:[%s1] sm:$0xff]
        %v227 = vld [vmem:[%s2] sm:$0x1]
        %v229 = vlaneseq
        %v230 = vand.u32 %v229, 127
        %v231 = vlaneseq
        %v232 = vshrl.u32 %v231, 7
        %v233 = vsub.s32 %v230, %v232
        %v234 = vrot.slane %v225, %v233
        %vm235 = vcmask 64512
        %v236 = vsel %vm235, %v234, 0
        %238 = vmatprep.subr.mxu0 0.0
        %239 = vmatpush1.msra.mxu0 %v226
        %240 = vmatprep.subr.mxu0 0.0
        %241 = vmatpush1.msra.mxu0 0.0
        %242 = vmatprep.subr.mxu0 0.0
        %243 = vmatpush1.msra.mxu0 0.0
        %244 = vmatprep.subr.mxu0 0.0
        %245 = vmatpush1.msra.mxu0 0.0
        %246 = vmatprep.subr.mxu0 0.0
        %247 = vmatpush1.msra.mxu0 0.0
        %248 = vmatprep.subr.mxu0 0.0
        %249 = vmatpush1.msra.mxu0 0.0
        %250 = vmatprep.subr.mxu0 0.0
        %251 = vmatpush1.msra.mxu0 0.0
        %252 = vmatprep.subr.mxu0 0.0
        %253 = vmatpush1.msra.mxu0 0.0
        %254 = vmatprep.subr.mxu0 0.0
        %255 = vmatpush1.msra.mxu0 0.0
        %256 = vmatprep.subr.mxu0 0.0
        %257 = vmatpush1.msra.mxu0 0.0
        %258 = vmatprep.subr.mxu0 0.0
        %259 = vmatpush1.msra.mxu0 0.0
        %260 = vmatprep.subr.mxu0 0.0
        %261 = vmatpush1.msra.mxu0 0.0
        %262 = vmatprep.subr.mxu0 0.0
        %263 = vmatpush1.msra.mxu0 0.0
        %264 = vmatprep.subr.mxu0 0.0
        %265 = vmatpush1.msra.mxu0 0.0
        %266 = vmatprep.subr.mxu0 0.0
        %267 = vmatpush1.msra.mxu0 0.0
        %268 = vmatprep.subr.mxu0 0.0
        %269 = vmatpush1.msra.mxu0 0.0
        %270 = vmatprep.subr.mxu0 0.0
        %271 = vmatpush1.msra.mxu0 0.0
        %272 = vmatprep.subr.mxu0 0.0
        %273 = vmatpush1.msra.mxu0 0.0
        %274 = vmatprep.subr.mxu0 0.0
        %275 = vmatpush1.msra.mxu0 0.0
        %276 = vmatprep.subr.mxu0 0.0
        %277 = vmatpush1.msra.mxu0 0.0
        %278 = vmatprep.subr.mxu0 0.0
        %279 = vmatpush1.msra.mxu0 0.0
        %280 = vmatprep.subr.mxu0 0.0
        %281 = vmatpush1.msra.mxu0 0.0
        %282 = vmatprep.subr.mxu0 0.0
        %283 = vmatpush1.msra.mxu0 0.0
        %284 = vmatprep.subr.mxu0 0.0
        %285 = vmatpush1.msra.mxu0 0.0
        %286 = vmatprep.subr.mxu0 0.0
        %287 = vmatpush1.msra.mxu0 0.0
        %288 = vmatprep.subr.mxu0 0.0
        %289 = vmatpush1.msra.mxu0 0.0
        %290 = vmatprep.subr.mxu0 0.0
        %291 = vmatpush1.msra.mxu0 0.0
        %292 = vmatprep.subr.mxu0 0.0
        %293 = vmatpush1.msra.mxu0 0.0
        %294 = vmatprep.subr.mxu0 0.0
        %295 = vmatpush1.msra.mxu0 0.0
        %296 = vmatprep.subr.mxu0 0.0
        %297 = vmatpush1.msra.mxu0 0.0
        %298 = vmatprep.subr.mxu0 0.0
        %299 = vmatpush1.msra.mxu0 0.0
        %300 = vmatprep.subr.mxu0 0.0
        %301 = vmatpush1.msra.mxu0 0.0
        %302 = vmatprep.mubr.f32.mxu0 0.0
        %303 = vmatmul.mubr.f32.gmra.mrb[0].mxu0 %v236
        %v304 = vpop.f32.mrb[0].mxu0
        %v305 = vadd.f32 %v227, %v304
        %v306 = vpop.f32.mrb[0].mxu0
        %307 = vdwg.mxu0
        %v308 = vmax.f32 %v305, 0.0
        %v309 = vld [vmem:[%s3] sm:$0xff]
        %v310 = vld [vmem:[%s4] sm:$0x1]
        %v312 = vsel %vm235, %v308, 0
        %314 = vmatprep.subr.mxu0 0.0
        %315 = vmatpush1.msra.mxu0 %v309
        %316 = vmatprep.subr.mxu0 0.0
        %317 = vmatpush1.msra.mxu0 0.0
        %318 = vmatprep.subr.mxu0 0.0
        %319 = vmatpush1.msra.mxu0 0.0
        %320 = vmatprep.subr.mxu0 0.0
        %321 = vmatpush1.msra.mxu0 0.0
        %322 = vmatprep.subr.mxu0 0.0
        %323 = vmatpush1.msra.mxu0 0.0
        %324 = vmatprep.subr.mxu0 0.0
        %325 = vmatpush1.msra.mxu0 0.0
        %326 = vmatprep.subr.mxu0 0.0
        %327 = vmatpush1.msra.mxu0 0.0
        %328 = vmatprep.subr.mxu0 0.0
        %329 = vmatpush1.msra.mxu0 0.0
        %330 = vmatprep.subr.mxu0 0.0
        %331 = vmatpush1.msra.mxu0 0.0
        %332 = vmatprep.subr.mxu0 0.0
        %333 = vmatpush1.msra.mxu0 0.0
        %334 = vmatprep.subr.mxu0 0.0
        %335 = vmatpush1.msra.mxu0 0.0
        %336 = vmatprep.subr.mxu0 0.0
        %337 = vmatpush1.msra.mxu0 0.0
        %338 = vmatprep.subr.mxu0 0.0
        %339 = vmatpush1.msra.mxu0 0.0
        %340 = vmatprep.subr.mxu0 0.0
        %341 = vmatpush1.msra.mxu0 0.0
        %342 = vmatprep.subr.mxu0 0.0
        %343 = vmatpush1.msra.mxu0 0.0
        %344 = vmatprep.subr.mxu0 0.0
        %345 = vmatpush1.msra.mxu0 0.0
        %346 = vmatprep.subr.mxu0 0.0
        %347 = vmatpush1.msra.mxu0 0.0
        %348 = vmatprep.subr.mxu0 0.0
        %349 = vmatpush1.msra.mxu0 0.0
        %350 = vmatprep.subr.mxu0 0.0
        %351 = vmatpush1.msra.mxu0 0.0
        %352 = vmatprep.subr.mxu0 0.0
        %353 = vmatpush1.msra.mxu0 0.0
        %354 = vmatprep.subr.mxu0 0.0
        %355 = vmatpush1.msra.mxu0 0.0
        %356 = vmatprep.subr.mxu0 0.0
        %357 = vmatpush1.msra.mxu0 0.0
        %358 = vmatprep.subr.mxu0 0.0
        %359 = vmatpush1.msra.mxu0 0.0
        %360 = vmatprep.subr.mxu0 0.0
        %361 = vmatpush1.msra.mxu0 0.0
        %362 = vmatprep.subr.mxu0 0.0
        %363 = vmatpush1.msra.mxu0 0.0
        %364 = vmatprep.subr.mxu0 0.0
        %365 = vmatpush1.msra.mxu0 0.0
        %366 = vmatprep.subr.mxu0 0.0
        %367 = vmatpush1.msra.mxu0 0.0
        %368 = vmatprep.subr.mxu0 0.0
        %369 = vmatpush1.msra.mxu0 0.0
        %370 = vmatprep.subr.mxu0 0.0
        %371 = vmatpush1.msra.mxu0 0.0
        %372 = vmatprep.subr.mxu0 0.0
        %373 = vmatpush1.msra.mxu0 0.0
        %374 = vmatprep.subr.mxu0 0.0
        %375 = vmatpush1.msra.mxu0 0.0
        %376 = vmatprep.subr.mxu0 0.0
        %377 = vmatpush1.msra.mxu0 0.0
        %378 = vmatprep.mubr.f32.mxu0 0.0
        %379 = vmatmul.mubr.f32.gmra.mrb[0].mxu0 %v312
        %v380 = vpop.f32.mrb[0].mxu0
        %v381 = vadd.f32 %v310, %v380
        %v382 = vpop.f32.mrb[0].mxu0
        %383 = vdwg.mxu0
        %v384 = vxor.u32 %v381, 2147483648
        %v385 = vmul.f32 %v384, 1.442695
        %v386 = vpow.pop %v385
        %v387 = vadd.f32 %v386, 1.0
        %v388 = vrcp.pop %v387
        %v389 = vmul.f32 1.0, %v388
        %v390 = vlaneseq
        %v391 = vshrl.u32 %v390, 7
        %v392 = vsub.s32 0, %v391
        %v393 = vrot.slane %v389, %v392
        %395 = vbcast.lane.b32.xlu0 %v393, 256
        %v396 = vpop.permute.xlu0 %395
        %v397 = vmul.f32 %v220, %v396
        %398 = vst.msk [vmem:[%s215] sm:$0xff] %vm221, %v397
        %s399 = sand.u32 %s137, 1
        %s400 = scalar_lea.sflag [#allocation3], %s399
        %s401 = sand.u32 %s137, 1
        %s402 = smul.addr %s401, 8
        %s403 = scalar_lea.vmem [#allocation2], %s402
        // Predicated region
        $region41: #{lca_forward.1} parent=39 // pred_check
          %p404 = pneg %p147
        $region42: #{lca_forward.1} parent=39 // pred_check_branch
          %406 = sbr.rel (%p404) target = $region44
        $region43: #{lca_forward.1} parent=39 // pred_region
          %s408 = ssub.s32 128, 128
          %409 = vsyncadd %s400, %s408
          %s410 = smul.addr %s19, 128
          %s411 = scalar_lea.hbm %s5, %s410
          %s413 = sshll.u32 %s403, 4
          %s414 = int_to_ptr.vmem [resolvable:$true] %s413
          %416 = dma.vmem_to_hbm [thread:$0]  %s414, 128, %s411, %s400
        $region44: #{lca_forward.1} parent=39 // pred_fallthru
          _
      $region40: #{lca_forward.1} parent=5 // pred_fallthru
        _
      %p417 = scmp.le.s32.totalorder 2, %s14
      // Predicated region
      $region45: #{lca_forward.1} parent=5 // pred_check
        %p418 = pneg %p417
      $region46: #{lca_forward.1} parent=5 // pred_check_branch
        %420 = sbr.rel (%p418) target = $region48
      $region47: #{lca_forward.1} parent=5 // pred_region
        %s421 = ssub.s32 %s14, 2
        // Predicated region
        $region49: #{lca_forward.1} parent=47 // pred_check
          %p422 = pneg %p153
        $region50: #{lca_forward.1} parent=47 // pred_check_branch
          %424 = sbr.rel (%p422) target = $region52
        $region51: #{lca_forward.1} parent=47 // pred_region
          %s425 = sand.u32 %s138, 1
          %s426 = scalar_lea.sflag [#allocation3], %s425
          %s427 = sand.u32 %s138, 1
          %s428 = smul.addr %s427, 8
          %s429 = scalar_lea.vmem [#allocation2], %s428
          %430 = dma.done %s426, 128
        $region52: #{lca_forward.1} parent=47 // pred_fallthru
          _
      $region48: #{lca_forward.1} parent=5 // pred_fallthru
        _
    $region6: #{lca_forward.1} parent=1 // loop_footer
      %s18 = sadd.s32 1, %s14
    $region7: #{lca_forward.1} parent=1 // loop_footer_branch
      %13 = sbr.rel target = $region3
    $region8: #{lca_forward.1} parent=1 // loop_exit
      _
    %431 = vsyncpa [#allocation3], 1
    %s432 = scalar_lea.sflag [#allocation3], 1
    %433 = vsyncpa %s432, 1

</llo_original>
